<compile_context>
chip_gen: v7x
topology: tpu7x:2x2x1
jax: 0.10.0
libtpu: 0.0.40
codegen_flags: <defaults>
</compile_context>

<pallas_src>
import jax
import jax.numpy as jnp
from jax.experimental import pallas as pl
from jax.experimental.pallas import tpu as pltpu

_G = 8        # rows per group (fills the 8 sublanes of a vreg)
_SLOTS = 4    # DMA slots in the HBM fallback (up to _SLOTS-1 groups in flight)


def _round_up(x, m):
    return ((x + m - 1) // m) * m


def _vmem_capacity_bytes():
    try:
        return int(pltpu.get_tpu_info().vmem_capacity_bytes)
    except Exception:  # conservative default (v7x physical VMEM per core)
        return 64 * 1024 * 1024


# ---------------------------------------------------------------------------
# Fast path: embedding table resident in VMEM, in-kernel gather.
# ---------------------------------------------------------------------------
def _stage_vmem_kernel(node_sm, time_sm, emb_ref, out_ref):
    """node_sm/time_sm: SMEM int32 (b_pad,); emb_ref: VMEM (N, D);
    out_ref: VMEM (tb, 1) scores for this batch tile."""
    tb = out_ref.shape[0]
    base = pl.program_id(0) * tb
    n_groups = tb // _G

    for g in range(n_groups):                       # static unroll (<= 16)
        gb = base + g * _G
        nrows = jnp.concatenate(
            [emb_ref[pl.ds(node_sm[gb + i], 1), :] for i in range(_G)], axis=0)
        trows = jnp.concatenate(
            [emb_ref[pl.ds(time_sm[gb + i], 1), :] for i in range(_G)], axis=0)
        # Sublane-dense multiply + one cross-lane reduce per group of 8 rows.
        out_ref[g * _G:(g + 1) * _G, :] = jnp.sum(
            nrows * trows, axis=-1, keepdims=True)


# ---------------------------------------------------------------------------
# Fallback: table in HBM, grouped + deeply pipelined row DMAs.
# ---------------------------------------------------------------------------
def _stage_hbm_kernel(node_sm, time_sm, emb_hbm, out_ref, nbuf, tbuf, sem):
    """emb_hbm: HBM (N, D); nbuf/tbuf: VMEM (_SLOTS, _G, D);
    sem: DMA sems (2, _SLOTS, _G); out_ref: VMEM (tb, 1)."""
    tb = out_ref.shape[0]
    base = pl.program_id(0) * tb
    n_groups = tb // _G

    def fetch(g, slot):
        gb = base + g * _G
        for i in range(_G):
            nid = node_sm[gb + i]
            tid = time_sm[gb + i]
            pltpu.make_async_copy(emb_hbm.at[pl.ds(nid, 1), :],
                                  nbuf.at[slot, pl.ds(i, 1), :],
                                  sem.at[0, slot, i]).start()
            pltpu.make_async_copy(emb_hbm.at[pl.ds(tid, 1), :],
                                  tbuf.at[slot, pl.ds(i, 1), :],
                                  sem.at[1, slot, i]).start()

    # Prime the pipeline with up to _SLOTS-1 groups.
    for g in range(min(_SLOTS - 1, n_groups)):
        fetch(g, g % _SLOTS)

    for g in range(n_groups):                       # static unroll (<= 16)
        slot = g % _SLOTS
        # Prefetch a future group (different slot / semaphores) BEFORE waiting
        # on the current one; its SMEM id reads also stay ahead of the waits.
        nxt = g + _SLOTS - 1
        if nxt < n_groups:
            fetch(nxt, nxt % _SLOTS)
        # Wait for the current group's 2*_G row DMAs (dst shapes match starts).
        for i in range(_G):
            pltpu.make_async_copy(emb_hbm.at[pl.ds(0, 1), :],
                                  nbuf.at[slot, pl.ds(i, 1), :],
                                  sem.at[0, slot, i]).wait()
            pltpu.make_async_copy(emb_hbm.at[pl.ds(0, 1), :],
                                  tbuf.at[slot, pl.ds(i, 1), :],
                                  sem.at[1, slot, i]).wait()
        # One sublane-dense multiply + a single cross-lane reduce per group.
        out_ref[g * _G:(g + 1) * _G, :] = jnp.sum(
            nbuf[slot] * tbuf[slot], axis=-1, keepdims=True)


def stage_forward(embedding, node_ids, time_ids, *, force_hbm=False):
    """STAGE forward pass: score[b] = <emb[node[b]], emb[time[b]]>.

    embedding            : (num_nodes, embedding_dim) float32
    node_ids, time_ids   : (batch,) integer ids
    returns              : (batch,) float32
    """
    embedding = jnp.asarray(embedding, jnp.float32)
    num_nodes, dim = embedding.shape
    batch = int(node_ids.shape[0])

    # Batch tiling: groups of 8 rows; pick tb so batches > 8 produce >= 2 grid
    # tiles (both TensorCores on v7x), capped at 128 rows per tile.
    b_pad8 = _round_up(batch, _G)
    tb = max(_G, min(128, _round_up(max(1, b_pad8 // 2), _G)))
    n_tiles = pl.cdiv(b_pad8, tb)
    b_pad = n_tiles * tb

    def prep(ids):
        # TODO(synk): PyTorch's nn.Embedding raises on out-of-range ids; here
        # they are clamped so the row gather can never fault.
        ids = jnp.clip(jnp.asarray(ids, jnp.int32), 0, num_nodes - 1)
        return jnp.pad(ids, (0, b_pad - batch))

    node_p, time_p = prep(node_ids), prep(time_ids)

    # VMEM-layout-padded table footprint (sublane x lane padding).
    table_bytes = _round_up(num_nodes, 8) * _round_up(dim, 128) * 4
    cap = _vmem_capacity_bytes()
    use_vmem_table = (not force_hbm) and (table_bytes <= cap // 4)

    if use_vmem_table:
        kernel = _stage_vmem_kernel
        in_specs = [pl.BlockSpec((num_nodes, dim), lambda t, n_sm, t_sm: (0, 0))]
        scratch_shapes = []
        vmem_limit = min(cap * 3 // 4, max(32 << 20, 2 * table_bytes + (8 << 20)))
    else:
        kernel = _stage_hbm_kernel
        in_specs = [pl.BlockSpec(memory_space=pl.ANY)]   # table stays in HBM
        scratch_shapes = [
            pltpu.VMEM((_SLOTS, _G, dim), jnp.float32),  # node-row group buffers
            pltpu.VMEM((_SLOTS, _G, dim), jnp.float32),  # time-row group buffers
            pltpu.SemaphoreType.DMA((2, _SLOTS, _G)),    # one sem per row DMA
        ]
        vmem_limit = 32 << 20

    grid_spec = pltpu.PrefetchScalarGridSpec(
        num_scalar_prefetch=2,                 # node ids, time ids -> SMEM
        grid=(n_tiles,),
        in_specs=in_specs,
        out_specs=pl.BlockSpec((tb, 1), lambda t, n_sm, t_sm: (t, 0)),
        scratch_shapes=scratch_shapes,
    )

    out = pl.pallas_call(
        kernel,
        out_shape=jax.ShapeDtypeStruct((b_pad, 1), jnp.float32),
        grid_spec=grid_spec,
        compiler_params=pltpu.CompilerParams(
            dimension_semantics=("parallel",),  # batch tiles across TensorCores
            vmem_limit_bytes=int(vmem_limit),
        ),
    )(node_p, time_p, embedding)

    return out[:batch, 0]


def xavier_uniform(key, num_nodes, embedding_dim):
    # torch.nn.init.xavier_uniform_ on a (num_nodes, embedding_dim) weight:
    # bound = sqrt(6 / (fan_in + fan_out)).
    bound = (6.0 / (num_nodes + embedding_dim)) ** 0.5
    return jax.random.uniform(key, (num_nodes, embedding_dim),
                              jnp.float32, -bound, bound)


if __name__ == "__main__":
    # TODO(synk): the original module derives num_nodes from a CSV adjacency
    # matrix (pd.read_csv('label.csv')); here it is a fixed synthetic constant.
    num_nodes = 16
    embedding_dim = 32
    batch = 8

    key = jax.random.PRNGKey(0)
    k_emb, k_node, k_time = jax.random.split(key, 3)

    embedding = xavier_uniform(k_emb, num_nodes, embedding_dim)
    node = jax.random.randint(k_node, (batch,), 0, num_nodes, dtype=jnp.int32)
    time_ids = jax.random.randint(k_time, (batch,), 0, num_nodes, dtype=jnp.int32)

    ref = jnp.sum(embedding[node] * embedding[time_ids], axis=1)

    # Fast path: table resident in VMEM, in-kernel gather.
    score = jax.block_until_ready(stage_forward(embedding, node, time_ids))
    assert score.shape == (batch,)
    assert jnp.allclose(score, ref, atol=1e-5, rtol=1e-5), (score, ref)

    # Also exercise the HBM-gather fallback used for large embedding tables.
    score_hbm = jax.block_until_ready(
        stage_forward(embedding, node, time_ids, force_hbm=True))
    assert jnp.allclose(score_hbm, ref, atol=1e-5, rtol=1e-5), (score_hbm, ref)

    print("KERNEL_OK")
</pallas_src>

<mosaic_0001>
module attributes {stable_mosaic.version = 11 : i64} {
  func.func @_stage_vmem_kernel(%arg0: i32, %arg1: memref<8xi32, #tpu.memory_space<smem>>, %arg2: memref<8xi32, #tpu.memory_space<smem>>, %arg3: memref<16x32xf32, #tpu.memory_space<vmem>>, %arg4: memref<8x1xf32, #tpu.memory_space<vmem>>) attributes {dimension_semantics = [#tpu.dimension_semantics<parallel>], iteration_bounds = array<i64: 1>, scalar_prefetch = 2 : i64, scratch_operands = 0 : i64, tpu.core_type = #tpu.core_type<tc>, window_params = [{pipeline_mode = #tpu.pipeline_mode<synchronous>, transform_indices = @transform_0, window_bounds = array<i64: 16, 32>}, {transform_indices = @transform_1, window_bounds = array<i64: 8, 1>}]} {
    %c8_i32 = arith.constant 8 : i32
    %0 = arith.muli %arg0, %c8_i32 : i32
    %c0_i32 = arith.constant 0 : i32
    %1 = arith.addi %0, %c0_i32 : i32
    %c0_i32_0 = arith.constant 0 : i32
    %2 = arith.addi %1, %c0_i32_0 : i32
    %3 = arith.index_cast %2 : i32 to index
    %4 = memref.load %arg1[%3] : memref<8xi32, #tpu.memory_space<smem>>
    %5 = arith.index_cast %4 : i32 to index
    %c0 = arith.constant 0 : index
    %6 = vector.load %arg3[%5, %c0] : memref<16x32xf32, #tpu.memory_space<vmem>>, vector<1x32xf32>
    %c1_i32 = arith.constant 1 : i32
    %7 = arith.addi %1, %c1_i32 : i32
    %8 = arith.index_cast %7 : i32 to index
    %9 = memref.load %arg1[%8] : memref<8xi32, #tpu.memory_space<smem>>
    %10 = arith.index_cast %9 : i32 to index
    %c0_1 = arith.constant 0 : index
    %11 = vector.load %arg3[%10, %c0_1] : memref<16x32xf32, #tpu.memory_space<vmem>>, vector<1x32xf32>
    %c2_i32 = arith.constant 2 : i32
    %12 = arith.addi %1, %c2_i32 : i32
    %13 = arith.index_cast %12 : i32 to index
    %14 = memref.load %arg1[%13] : memref<8xi32, #tpu.memory_space<smem>>
    %15 = arith.index_cast %14 : i32 to index
    %c0_2 = arith.constant 0 : index
    %16 = vector.load %arg3[%15, %c0_2] : memref<16x32xf32, #tpu.memory_space<vmem>>, vector<1x32xf32>
    %c3_i32 = arith.constant 3 : i32
    %17 = arith.addi %1, %c3_i32 : i32
    %18 = arith.index_cast %17 : i32 to index
    %19 = memref.load %arg1[%18] : memref<8xi32, #tpu.memory_space<smem>>
    %20 = arith.index_cast %19 : i32 to index
    %c0_3 = arith.constant 0 : index
    %21 = vector.load %arg3[%20, %c0_3] : memref<16x32xf32, #tpu.memory_space<vmem>>, vector<1x32xf32>
    %c4_i32 = arith.constant 4 : i32
    %22 = arith.addi %1, %c4_i32 : i32
    %23 = arith.index_cast %22 : i32 to index
    %24 = memref.load %arg1[%23] : memref<8xi32, #tpu.memory_space<smem>>
    %25 = arith.index_cast %24 : i32 to index
    %c0_4 = arith.constant 0 : index
    %26 = vector.load %arg3[%25, %c0_4] : memref<16x32xf32, #tpu.memory_space<vmem>>, vector<1x32xf32>
    %c5_i32 = arith.constant 5 : i32
    %27 = arith.addi %1, %c5_i32 : i32
    %28 = arith.index_cast %27 : i32 to index
    %29 = memref.load %arg1[%28] : memref<8xi32, #tpu.memory_space<smem>>
    %30 = arith.index_cast %29 : i32 to index
    %c0_5 = arith.constant 0 : index
    %31 = vector.load %arg3[%30, %c0_5] : memref<16x32xf32, #tpu.memory_space<vmem>>, vector<1x32xf32>
    %c6_i32 = arith.constant 6 : i32
    %32 = arith.addi %1, %c6_i32 : i32
    %33 = arith.index_cast %32 : i32 to index
    %34 = memref.load %arg1[%33] : memref<8xi32, #tpu.memory_space<smem>>
    %35 = arith.index_cast %34 : i32 to index
    %c0_6 = arith.constant 0 : index
    %36 = vector.load %arg3[%35, %c0_6] : memref<16x32xf32, #tpu.memory_space<vmem>>, vector<1x32xf32>
    %c7_i32 = arith.constant 7 : i32
    %37 = arith.addi %1, %c7_i32 : i32
    %38 = arith.index_cast %37 : i32 to index
    %39 = memref.load %arg1[%38] : memref<8xi32, #tpu.memory_space<smem>>
    %40 = arith.index_cast %39 : i32 to index
    %c0_7 = arith.constant 0 : index
    %41 = vector.load %arg3[%40, %c0_7] : memref<16x32xf32, #tpu.memory_space<vmem>>, vector<1x32xf32>
    %42 = tpu.concatenate %6, %11, %16, %21, %26, %31, %36, %41 in 0 : vector<1x32xf32>, vector<1x32xf32>, vector<1x32xf32>, vector<1x32xf32>, vector<1x32xf32>, vector<1x32xf32>, vector<1x32xf32>, vector<1x32xf32> -> vector<8x32xf32>
    %c0_i32_8 = arith.constant 0 : i32
    %43 = arith.addi %1, %c0_i32_8 : i32
    %44 = arith.index_cast %43 : i32 to index
    %45 = memref.load %arg2[%44] : memref<8xi32, #tpu.memory_space<smem>>
    %46 = arith.index_cast %45 : i32 to index
    %c0_9 = arith.constant 0 : index
    %47 = vector.load %arg3[%46, %c0_9] : memref<16x32xf32, #tpu.memory_space<vmem>>, vector<1x32xf32>
    %c1_i32_10 = arith.constant 1 : i32
    %48 = arith.addi %1, %c1_i32_10 : i32
    %49 = arith.index_cast %48 : i32 to index
    %50 = memref.load %arg2[%49] : memref<8xi32, #tpu.memory_space<smem>>
    %51 = arith.index_cast %50 : i32 to index
    %c0_11 = arith.constant 0 : index
    %52 = vector.load %arg3[%51, %c0_11] : memref<16x32xf32, #tpu.memory_space<vmem>>, vector<1x32xf32>
    %c2_i32_12 = arith.constant 2 : i32
    %53 = arith.addi %1, %c2_i32_12 : i32
    %54 = arith.index_cast %53 : i32 to index
    %55 = memref.load %arg2[%54] : memref<8xi32, #tpu.memory_space<smem>>
    %56 = arith.index_cast %55 : i32 to index
    %c0_13 = arith.constant 0 : index
    %57 = vector.load %arg3[%56, %c0_13] : memref<16x32xf32, #tpu.memory_space<vmem>>, vector<1x32xf32>
    %c3_i32_14 = arith.constant 3 : i32
    %58 = arith.addi %1, %c3_i32_14 : i32
    %59 = arith.index_cast %58 : i32 to index
    %60 = memref.load %arg2[%59] : memref<8xi32, #tpu.memory_space<smem>>
    %61 = arith.index_cast %60 : i32 to index
    %c0_15 = arith.constant 0 : index
    %62 = vector.load %arg3[%61, %c0_15] : memref<16x32xf32, #tpu.memory_space<vmem>>, vector<1x32xf32>
    %c4_i32_16 = arith.constant 4 : i32
    %63 = arith.addi %1, %c4_i32_16 : i32
    %64 = arith.index_cast %63 : i32 to index
    %65 = memref.load %arg2[%64] : memref<8xi32, #tpu.memory_space<smem>>
    %66 = arith.index_cast %65 : i32 to index
    %c0_17 = arith.constant 0 : index
    %67 = vector.load %arg3[%66, %c0_17] : memref<16x32xf32, #tpu.memory_space<vmem>>, vector<1x32xf32>
    %c5_i32_18 = arith.constant 5 : i32
    %68 = arith.addi %1, %c5_i32_18 : i32
    %69 = arith.index_cast %68 : i32 to index
    %70 = memref.load %arg2[%69] : memref<8xi32, #tpu.memory_space<smem>>
    %71 = arith.index_cast %70 : i32 to index
    %c0_19 = arith.constant 0 : index
    %72 = vector.load %arg3[%71, %c0_19] : memref<16x32xf32, #tpu.memory_space<vmem>>, vector<1x32xf32>
    %c6_i32_20 = arith.constant 6 : i32
    %73 = arith.addi %1, %c6_i32_20 : i32
    %74 = arith.index_cast %73 : i32 to index
    %75 = memref.load %arg2[%74] : memref<8xi32, #tpu.memory_space<smem>>
    %76 = arith.index_cast %75 : i32 to index
    %c0_21 = arith.constant 0 : index
    %77 = vector.load %arg3[%76, %c0_21] : memref<16x32xf32, #tpu.memory_space<vmem>>, vector<1x32xf32>
    %c7_i32_22 = arith.constant 7 : i32
    %78 = arith.addi %1, %c7_i32_22 : i32
    %79 = arith.index_cast %78 : i32 to index
    %80 = memref.load %arg2[%79] : memref<8xi32, #tpu.memory_space<smem>>
    %81 = arith.index_cast %80 : i32 to index
    %c0_23 = arith.constant 0 : index
    %82 = vector.load %arg3[%81, %c0_23] : memref<16x32xf32, #tpu.memory_space<vmem>>, vector<1x32xf32>
    %83 = tpu.concatenate %47, %52, %57, %62, %67, %72, %77, %82 in 0 : vector<1x32xf32>, vector<1x32xf32>, vector<1x32xf32>, vector<1x32xf32>, vector<1x32xf32>, vector<1x32xf32>, vector<1x32xf32>, vector<1x32xf32> -> vector<8x32xf32>
    %84 = arith.mulf %42, %83 : vector<8x32xf32>
    %cst = arith.constant dense<0.000000e+00> : vector<8xf32>
    %85 = vector.multi_reduction <add>, %84, %cst [1] : vector<8x32xf32> to vector<8xf32>
    %86 = vector.shape_cast %85 : vector<8xf32> to vector<8x1xf32>
    %c0_24 = arith.constant 0 : index
    %c0_25 = arith.constant 0 : index
    %87 = vector.load %arg4[%c0_24, %c0_25] : memref<8x1xf32, #tpu.memory_space<vmem>>, vector<8x1xf32>
    tpu.vector_store %arg4[%c0_24, %c0_25], %86 {strides = array<i32>} : memref<8x1xf32, #tpu.memory_space<vmem>>, vector<8x1xf32>,
    return
  }
  func.func @transform_0(%arg0: i32, %arg1: memref<8xi32, #tpu.memory_space<smem>>, %arg2: memref<8xi32, #tpu.memory_space<smem>>) -> (i32, i32) {
    %c0_i32 = arith.constant 0 : i32
    %c0_i32_0 = arith.constant 0 : i32
    %c0_i32_1 = arith.constant 0 : i32
    return %c0_i32, %c0_i32_0 : i32, i32
  }
  func.func @transform_1(%arg0: i32, %arg1: memref<8xi32, #tpu.memory_space<smem>>, %arg2: memref<8xi32, #tpu.memory_space<smem>>) -> (i32, i32) {
    %c0_i32 = arith.constant 0 : i32
    %c0_i32_0 = arith.constant 0 : i32
    return %arg0, %c0_i32 : i32, i32
  }
}

</mosaic_0001>

<llo_original>
// kernel: tpu_custom_call.1
$region0: #{tpu_custom_call.1}
  #allocation0 [shape = 'u32[]', space=smem, size = 0x4, offset = 0x4, fixed_abs, tag = 'smem constant byte address 0x4 - core index']
  #allocation1 [shape = 'u32[144,128]{1,0:T(1,128)}', space=vmem, size = 0x12000, scoped, tag = 'internal scratch']
  #allocation2 [shape = 's32[1]{0}', space=sflag, size = 0x4, scoped, tag = 'scoped memory for tpu_custom_call.1']
  #allocation3 [shape = 'u8[512]{0}', space=smem, size = 0x200, scoped, tag = 'prefetched SMEM operand 0']
  #allocation4 [shape = 'u8[512]{0}', space=smem, size = 0x200, scoped, tag = 'prefetched SMEM operand 1']
  %s0 = inlined_call_operand.hbm [shape: s32[8], index: 0, kind: input, shape index: {}]
  %s1 = inlined_call_operand.vmem [shape: s32[8], index: 1, kind: input, shape index: {}]
  %s2 = inlined_call_operand.hbm [shape: f32[16,32], index: 2, kind: input, shape index: {}]
  %s3 = inlined_call_operand.vmem [shape: f32[8,1], index: 3, kind: output, shape index: {}]
  %s4 = sld [smem:[#allocation0]]
  $region18: #{tpu_custom_call.1} parent=0
    _
  %s6 = ssub.s32 1, %s4
  %s7 = scalar_select 0, %s6, %s4
  %9 = dma.hbm_to_smem %s0, 16, [#allocation3], [#allocation2]
  %s10 = sshll.u32 %s1, 4
  %s11 = int_to_ptr.vmem [resolvable:$true] %s10
  %13 = dma.vmem_to_smem %s11, 16, [#allocation4], [#allocation2]
  %14 = dma.done [#allocation2], 32
  %15 = sfence
  $region1: #{tpu_custom_call.1} parent=0
    #allocation5 [shape = 'u8[8192]{0}', space=vmem, size = 0x2000, scoped, tag = 'input window, operand 2, single buffered']
    #allocation6 [shape = 's32[1]{0}', space=sflag, size = 0x4, scoped, tag = 'scoped memory for tpu_custom_call.1']
    %16 = vsyncpa [#allocation6], 0
    // Predicated region
    $region2: #{tpu_custom_call.1} parent=1 // pred_check
      _
    $region3: #{tpu_custom_call.1} parent=1 // pred_check_branch
      %18 = sbr.rel (0) target = $region5
    $region4: #{tpu_custom_call.1} parent=1 // pred_region
      %s20 = ssub.s32 256, 256
      %21 = vsyncadd [#allocation6], %s20
      %s22 = sshll.u32 [#allocation5], 4
      %s23 = int_to_ptr.vmem [resolvable:$true] %s22
      %28 = dma.hbm_to_vmem [thread:$0]  %s2, 256, %s23, [#allocation6], 128, 128, 8
    $region5: #{tpu_custom_call.1} parent=1 // pred_fallthru
      _
    // Predicated region
    $region6: #{tpu_custom_call.1} parent=1 // pred_check
      _
    $region7: #{tpu_custom_call.1} parent=1 // pred_check_branch
      %30 = sbr.rel (0) target = $region9
    $region8: #{tpu_custom_call.1} parent=1 // pred_region
      %31 = dma.done [#allocation6], 256
    $region9: #{tpu_custom_call.1} parent=1 // pred_fallthru
      _
    %s32 = smul.u32 0, 8
    %s33 = sld [smem:[#allocation3 + %s32]]
    %s34 = scalar_lea.vmem [#allocation5], %s33
    %v35 = vld [vmem:[%s34] sm:$0x1]
    %s36 = sadd.s32 %s32, 1
    %s37 = sld [smem:[#allocation3 + %s36]]
    %s38 = scalar_lea.vmem [#allocation5], %s37
    %v39 = vld [vmem:[%s38] sm:$0x1]
    %s40 = sadd.s32 %s32, 2
    %s41 = sld [smem:[#allocation3 + %s40]]
    %s42 = scalar_lea.vmem [#allocation5], %s41
    %v43 = vld [vmem:[%s42] sm:$0x1]
    %s44 = sadd.s32 %s32, 3
    %s45 = sld [smem:[#allocation3 + %s44]]
    %s46 = scalar_lea.vmem [#allocation5], %s45
    %v47 = vld [vmem:[%s46] sm:$0x1]
    %s48 = sadd.s32 %s32, 4
    %s49 = sld [smem:[#allocation3 + %s48]]
    %s50 = scalar_lea.vmem [#allocation5], %s49
    %v51 = vld [vmem:[%s50] sm:$0x1]
    %s52 = sadd.s32 %s32, 5
    %s53 = sld [smem:[#allocation3 + %s52]]
    %s54 = scalar_lea.vmem [#allocation5], %s53
    %v55 = vld [vmem:[%s54] sm:$0x1]
    %s56 = sadd.s32 %s32, 6
    %s57 = sld [smem:[#allocation3 + %s56]]
    %s58 = scalar_lea.vmem [#allocation5], %s57
    %v59 = vld [vmem:[%s58] sm:$0x1]
    %s60 = sadd.s32 %s32, 7
    %s61 = sld [smem:[#allocation3 + %s60]]
    %s62 = scalar_lea.vmem [#allocation5], %s61
    %v63 = vld [vmem:[%s62] sm:$0x1]
    %v65 = vrot.slane %v39, 7
    %v68 = vrot.slane %v43, 6
    %v71 = vrot.slane %v47, 5
    %v74 = vrot.slane %v51, 4
    %v77 = vrot.slane %v55, 3
    %v80 = vrot.slane %v59, 2
    %v83 = vrot.slane %v63, 1
    %vm85 = vcmask 1040384
    %v86 = vsel %vm85, %v35, %v65
    %vm87 = vcmask 1041408
    %v88 = vsel %vm87, %v86, %v68
    %vm89 = vcmask 1042432
    %v90 = vsel %vm89, %v88, %v71
    %vm91 = vcmask 1043456
    %v92 = vsel %vm91, %v90, %v74
    %vm93 = vcmask 1044480
    %v94 = vsel %vm93, %v92, %v77
    %vm95 = vcmask 1045504
    %v96 = vsel %vm95, %v94, %v80
    %vm97 = vcmask 1046528
    %v98 = vsel %vm97, %v96, %v83
    %s99 = sld [smem:[#allocation4 + %s32]]
    %s100 = scalar_lea.vmem [#allocation5], %s99
    %v101 = vld [vmem:[%s100] sm:$0x1]
    %s102 = sld [smem:[#allocation4 + %s36]]
    %s103 = scalar_lea.vmem [#allocation5], %s102
    %v104 = vld [vmem:[%s103] sm:$0x1]
    %s105 = sld [smem:[#allocation4 + %s40]]
    %s106 = scalar_lea.vmem [#allocation5], %s105
    %v107 = vld [vmem:[%s106] sm:$0x1]
    %s108 = sld [smem:[#allocation4 + %s44]]
    %s109 = scalar_lea.vmem [#allocation5], %s108
    %v110 = vld [vmem:[%s109] sm:$0x1]
    %s111 = sld [smem:[#allocation4 + %s48]]
    %s112 = scalar_lea.vmem [#allocation5], %s111
    %v113 = vld [vmem:[%s112] sm:$0x1]
    %s114 = sld [smem:[#allocation4 + %s52]]
    %s115 = scalar_lea.vmem [#allocation5], %s114
    %v116 = vld [vmem:[%s115] sm:$0x1]
    %s117 = sld [smem:[#allocation4 + %s56]]
    %s118 = scalar_lea.vmem [#allocation5], %s117
    %v119 = vld [vmem:[%s118] sm:$0x1]
    %s120 = sld [smem:[#allocation4 + %s60]]
    %s121 = scalar_lea.vmem [#allocation5], %s120
    %v122 = vld [vmem:[%s121] sm:$0x1]
    %v124 = vrot.slane %v104, 7
    %v127 = vrot.slane %v107, 6
    %v130 = vrot.slane %v110, 5
    %v133 = vrot.slane %v113, 4
    %v136 = vrot.slane %v116, 3
    %v139 = vrot.slane %v119, 2
    %v142 = vrot.slane %v122, 1
    %v144 = vsel %vm85, %v101, %v124
    %v145 = vsel %vm87, %v144, %v127
    %v146 = vsel %vm89, %v145, %v130
    %v147 = vsel %vm91, %v146, %v133
    %v148 = vsel %vm93, %v147, %v136
    %v149 = vsel %vm95, %v148, %v139
    %v150 = vsel %vm97, %v149, %v142
    %v151 = vmul.f32 %v98, %v150
    %vm152 = vcmask 261120
    %v153 = vsel %vm152, %v151, 0.0
    %154 = vadd.xlane.f32.xlu0 %v153
    %v155 = vpop.xlane.xlu0 %154
    %vm156 = vcmask 7168
    %157 = vst.msk [vmem:[%s3] sm:$0xff] %vm156, %v155
    // Predicated region
    $region10: #{tpu_custom_call.1} parent=1 // pred_check
      _
    $region11: #{tpu_custom_call.1} parent=1 // pred_check_branch
      %159 = sbr.rel (0) target = $region13
    $region12: #{tpu_custom_call.1} parent=1 // pred_region
      _
    $region13: #{tpu_custom_call.1} parent=1 // pred_fallthru
      _
    // Predicated region
    $region14: #{tpu_custom_call.1} parent=1 // pred_check
      _
    $region15: #{tpu_custom_call.1} parent=1 // pred_check_branch
      %161 = sbr.rel (0) target = $region17
    $region16: #{tpu_custom_call.1} parent=1 // pred_region
      _
    $region17: #{tpu_custom_call.1} parent=1 // pred_fallthru
      _
    %162 = vsyncpa [#allocation6], 1

</llo_original>
